<compile_context>
chip_gen: v7x
topology: tpu7x:2x2x1
jax: 0.10.0
libtpu: 0.0.40
codegen_flags: <defaults>
</compile_context>

<pallas_src>
import functools

import jax
import jax.numpy as jnp
import numpy as np
from jax import lax
from jax.experimental import pallas as pl
from jax.experimental.pallas import tpu as pltpu

FEAT = 64                                   # feature_dim of SharedNetwork
NEG = -1e30                                 # finite "-inf" (keeps exp/log NaN-free)
OUT_ROWS = 8                                # output slab sublane count
ACT_ROW, LOGP_ROW, ENT_ROW, VAL_ROW = 0, 1, 2, 3


def _round_up(x, m):
    return (x + m - 1) // m * m


def a2c_kernel(x_ref, g_ref, w1_ref, b1_ref, wh_ref, bh_ref, out_ref, *, action_dim):
    """One batch tile. Batch lives on the LANE axis throughout."""
    # ---- shared network: Linear + ReLU (w1^T @ x) ----
    # w1_ref: [FEAT, S], x_ref: [S, TB] -> h: [FEAT, TB]
    h = jnp.dot(w1_ref[...], x_ref[...], preferred_element_type=jnp.float32) + b1_ref[...]
    h = jnp.maximum(h, 0.0)

    # ---- fused actor + critic heads: ONE matmul ----
    # wh_ref: [HEAD_W, FEAT] -> ho: [HEAD_W, TB]; rows [0, A) = logits, row NW8 = value
    ho = jnp.dot(wh_ref[...], h, preferred_element_type=jnp.float32) + bh_ref[...]

    nw = g_ref.shape[0]                       # round_up(action_dim, 8) (static)
    lg = ho[:nw, :]                           # [NW8, TB]  logit rows
    row = lax.broadcasted_iota(jnp.int32, lg.shape, 0)
    valid = row < action_dim
    logits = jnp.where(valid, lg, NEG)

    # ---- numerically stable log-softmax / entropy over the action (sublane) axis ----
    m = jnp.max(logits, axis=0, keepdims=True)               # [1, TB]
    z = logits - m
    ez = jnp.exp(z)                                          # padded rows -> exactly 0
    sumexp = jnp.sum(ez, axis=0, keepdims=True)
    log_sumexp = jnp.log(sumexp)
    logp_all = z - log_sumexp
    # entropy = log(sumexp) - sum(ez*z)/sumexp ; exact division on [1,TB] only
    entropy = log_sumexp - jnp.sum(ez * z, axis=0, keepdims=True) / sumexp

    # ---- Gumbel-max categorical sampling (host-supplied Gumbel noise) ----
    noisy = logits + g_ref[...]                              # padded rows stay ~NEG
    nmax = jnp.max(noisy, axis=0, keepdims=True)
    is_max = (noisy >= nmax) & valid
    actions = jnp.min(jnp.where(is_max, row, action_dim), axis=0, keepdims=True)  # [1,TB]
    # strict first-match gather of the log-prob at the chosen action (tie-safe)
    chosen = row == actions
    log_probs = jnp.sum(jnp.where(chosen, logp_all, 0.0), axis=0, keepdims=True)

    value = ho[nw:nw + 1, :]                                  # [1, TB] critic value

    # ---- pack into the lane-dense [8, TB] output slab ----
    r8 = lax.broadcasted_iota(jnp.int32, out_ref.shape, 0)
    slab = jnp.where(r8 == ACT_ROW, actions.astype(jnp.float32), 0.0)
    slab = jnp.where(r8 == LOGP_ROW, log_probs, slab)
    slab = jnp.where(r8 == ENT_ROW, entropy, slab)
    slab = jnp.where(r8 == VAL_ROW, value, slab)
    out_ref[...] = slab


def pack_params(params, state_dim, action_dim, feature_dim=FEAT):
    """Transpose + fuse the per-layer parameters into MXU-friendly slabs (one-time)."""
    assert action_dim >= 1
    assert params["w1"].shape == (state_dim, feature_dim)
    assert params["wa"].shape == (feature_dim, action_dim)
    assert params["wc"].shape == (feature_dim, 1)
    nw8 = _round_up(action_dim, 8)
    head_w = nw8 + 8                           # logit rows [0, A), value row at nw8
    w1t = jnp.asarray(params["w1"], jnp.float32).T                    # [FEAT, S]
    b1 = jnp.asarray(params["b1"], jnp.float32).reshape(feature_dim, 1)
    wh = jnp.zeros((head_w, feature_dim), jnp.float32)
    wh = wh.at[:action_dim, :].set(jnp.asarray(params["wa"], jnp.float32).T)
    wh = wh.at[nw8, :].set(jnp.asarray(params["wc"], jnp.float32)[:, 0])
    bh = jnp.zeros((head_w, 1), jnp.float32)
    bh = bh.at[:action_dim, 0].set(jnp.asarray(params["ba"], jnp.float32))
    bh = bh.at[nw8, 0].set(jnp.asarray(params["bc"], jnp.float32)[0])
    return {"w1t": w1t, "b1": b1, "wh": wh, "bh": bh, "nw8": nw8}


def a2c_forward(state, packed, action_dim, *, rng_key, max_tile_b=1024):
    """state: [B, state_dim] f32 -> dict(actions, log_probs, entropy, values).

    The caller must pass a fresh `rng_key` per environment step (the sampling
    noise is derived from it).
    """
    B, S = state.shape
    nw8 = packed["nw8"]
    head_w = packed["wh"].shape[0]
    assert packed["w1t"].shape == (FEAT, S)

    # ---- tiling: batch sits on the lane axis ----
    b8 = _round_up(B, 8)
    if b8 <= 128:
        tile_b, b_pad = b8, b8                 # single tile (lane block == full dim)
    else:
        # multi-tile: lane blocks must be multiples of 128; aim for >= 2 grid
        # steps so the "parallel" axis can use both TensorCores on v7x.
        tile_b = min(_round_up(max_tile_b, 128), _round_up(-(-b8 // 2), 128))
        tile_b = max(tile_b, 128)
        b_pad = _round_up(b8, tile_b)

    # Present the state with batch on the lane axis; pad only the ragged tail.
    # TODO(synk): for a fully mem-bound deployment, produce the state already
    # transposed upstream to avoid this extra XLA transpose pass.
    xt = jnp.transpose(state).astype(jnp.float32)            # [S, B]
    if b_pad != B:
        xt = jnp.pad(xt, ((0, 0), (0, b_pad - B)))

    # Host-side Gumbel noise, already in kernel layout: [NW8, b_pad].
    gumbel = jax.random.gumbel(rng_key, (nw8, b_pad), jnp.float32)

    out = pl.pallas_call(
        functools.partial(a2c_kernel, action_dim=action_dim),
        out_shape=jax.ShapeDtypeStruct((OUT_ROWS, b_pad), jnp.float32),
        grid=(b_pad // tile_b,),
        in_specs=[
            pl.BlockSpec((S, tile_b), lambda i: (0, i)),       # state tile
            pl.BlockSpec((nw8, tile_b), lambda i: (0, i)),     # Gumbel noise tile
            pl.BlockSpec((FEAT, S), lambda i: (0, 0)),         # w1^T (resident)
            pl.BlockSpec((FEAT, 1), lambda i: (0, 0)),         # b1   (resident)
            pl.BlockSpec((head_w, FEAT), lambda i: (0, 0)),    # fused head W (resident)
            pl.BlockSpec((head_w, 1), lambda i: (0, 0)),       # fused head b (resident)
        ],
        out_specs=pl.BlockSpec((OUT_ROWS, tile_b), lambda i: (0, i)),
        compiler_params=pltpu.CompilerParams(
            dimension_semantics=("parallel",),
            vmem_limit_bytes=32 * 1024 * 1024),
    )(xt, gumbel, packed["w1t"], packed["b1"], packed["wh"], packed["bh"])

    out = out[:, :B]
    return {
        "actions": out[ACT_ROW].astype(jnp.int32),
        "log_probs": out[LOGP_ROW],
        "entropy": out[ENT_ROW],
        "values": out[VAL_ROW],                # value_pred.squeeze()
    }


def init_params(key, state_dim, action_dim, feature_dim=FEAT):
    k1, k2, k3, k4, k5, k6 = jax.random.split(key, 6)
    s = 0.1
    return {
        "w1": s * jax.random.normal(k1, (state_dim, feature_dim), jnp.float32),
        "b1": s * jax.random.normal(k2, (feature_dim,), jnp.float32),
        "wc": s * jax.random.normal(k3, (feature_dim, 1), jnp.float32),
        "bc": s * jax.random.normal(k4, (1,), jnp.float32),
        "wa": s * jax.random.normal(k5, (feature_dim, action_dim), jnp.float32),
        "ba": s * jax.random.normal(k6, (action_dim,), jnp.float32),
    }


def reference(state, params):
    """Pure-JAX reference for the forward pass."""
    hp = jax.lax.Precision.HIGHEST
    h = jnp.maximum(jnp.dot(state, params["w1"], precision=hp) + params["b1"], 0.0)
    value = (jnp.dot(h, params["wc"], precision=hp) + params["bc"])[:, 0]
    logits = jnp.dot(h, params["wa"], precision=hp) + params["ba"]
    logp = jax.nn.log_softmax(logits, axis=-1)
    probs = jnp.exp(logp)
    entropy = -jnp.sum(probs * logp, axis=-1)
    return value, logits, logp, entropy


if __name__ == "__main__":
    B, STATE_DIM, ACTION_DIM = 8, 16, 8

    key = jax.random.PRNGKey(0)
    k_params, k_state, k_sample = jax.random.split(key, 3)

    params = init_params(k_params, STATE_DIM, ACTION_DIM)
    packed = pack_params(params, STATE_DIM, ACTION_DIM)
    state = jax.random.normal(k_state, (B, STATE_DIM), jnp.float32)

    out = a2c_forward(state, packed, ACTION_DIM, rng_key=k_sample)
    jax.block_until_ready(out)

    assert out["actions"].shape == (B,)
    assert out["log_probs"].shape == (B,)
    assert out["entropy"].shape == (B,)
    assert out["values"].shape == (B,)

    ref_value, ref_logits, ref_logp, ref_entropy = reference(state, params)
    acts = np.asarray(out["actions"])
    assert np.all((acts >= 0) & (acts < ACTION_DIM))

    np.testing.assert_allclose(np.asarray(out["values"]), np.asarray(ref_value),
                               rtol=1e-4, atol=1e-4)
    np.testing.assert_allclose(np.asarray(out["entropy"]), np.asarray(ref_entropy),
                               rtol=1e-4, atol=1e-4)

    # Sampling is deterministic given the same key: reproduce the Gumbel noise
    # (same key / shape as inside a2c_forward since b_pad == B here) and check
    # the argmax-selected action exactly.
    g = np.asarray(jax.random.gumbel(k_sample, (packed["nw8"], B), jnp.float32))
    ref_acts = np.argmax(np.asarray(ref_logits) + g[:ACTION_DIM, :].T, axis=-1)
    assert np.array_equal(acts, ref_acts)

    ref_lp_at_act = np.asarray(ref_logp)[np.arange(B), acts]
    np.testing.assert_allclose(np.asarray(out["log_probs"]), ref_lp_at_act,
                               rtol=1e-4, atol=1e-4)

    print("KERNEL_OK")
</pallas_src>

<mosaic_0001>
module attributes {stable_mosaic.version = 11 : i64} {
  func.func @a2c_kernel(%arg0: i32, %arg1: memref<16x8xf32, #tpu.memory_space<vmem>>, %arg2: memref<8x8xf32, #tpu.memory_space<vmem>>, %arg3: memref<64x16xf32, #tpu.memory_space<vmem>>, %arg4: memref<64x1xf32, #tpu.memory_space<vmem>>, %arg5: memref<16x64xf32, #tpu.memory_space<vmem>>, %arg6: memref<16x1xf32, #tpu.memory_space<vmem>>, %arg7: memref<8x8xf32, #tpu.memory_space<vmem>>) attributes {dimension_semantics = [#tpu.dimension_semantics<parallel>], iteration_bounds = array<i64: 1>, scalar_prefetch = 0 : i64, scratch_operands = 0 : i64, tpu.core_type = #tpu.core_type<tc>, window_params = [{transform_indices = @transform_0, window_bounds = array<i64: 16, 8>}, {transform_indices = @transform_1, window_bounds = array<i64: 8, 8>}, {pipeline_mode = #tpu.pipeline_mode<synchronous>, transform_indices = @transform_2, window_bounds = array<i64: 64, 16>}, {pipeline_mode = #tpu.pipeline_mode<synchronous>, transform_indices = @transform_3, window_bounds = array<i64: 64, 1>}, {pipeline_mode = #tpu.pipeline_mode<synchronous>, transform_indices = @transform_4, window_bounds = array<i64: 16, 64>}, {pipeline_mode = #tpu.pipeline_mode<synchronous>, transform_indices = @transform_5, window_bounds = array<i64: 16, 1>}, {transform_indices = @transform_6, window_bounds = array<i64: 8, 8>}]} {
    %c0 = arith.constant 0 : index
    %c0_0 = arith.constant 0 : index
    %0 = vector.load %arg3[%c0, %c0_0] : memref<64x16xf32, #tpu.memory_space<vmem>>, vector<64x16xf32>
    %c0_1 = arith.constant 0 : index
    %c0_2 = arith.constant 0 : index
    %1 = vector.load %arg1[%c0_1, %c0_2] : memref<16x8xf32, #tpu.memory_space<vmem>>, vector<16x8xf32>
    %cst = arith.constant dense<0.000000e+00> : vector<64x8xf32>
    %2 = tpu.matmul %0, %1, %cst {dimension_numbers = #tpu.dot_dimension_numbers<[1], [0], [0], [1], [0, 0, 1, 1], [], []>} : vector<64x16xf32>, vector<16x8xf32>, vector<64x8xf32> -> vector<64x8xf32>
    %c0_3 = arith.constant 0 : index
    %c0_4 = arith.constant 0 : index
    %3 = vector.load %arg4[%c0_3, %c0_4] : memref<64x1xf32, #tpu.memory_space<vmem>>, vector<64x1xf32>
    %4 = vector.broadcast %3 : vector<64x1xf32> to vector<64x8xf32>
    %5 = arith.addf %2, %4 : vector<64x8xf32>
    %cst_5 = arith.constant 0.000000e+00 : f32
    %6 = vector.broadcast %cst_5 : f32 to vector<64x8xf32>
    %7 = arith.maximumf %5, %6 : vector<64x8xf32>
    %c0_6 = arith.constant 0 : index
    %c0_7 = arith.constant 0 : index
    %8 = vector.load %arg5[%c0_6, %c0_7] : memref<16x64xf32, #tpu.memory_space<vmem>>, vector<16x64xf32>
    %cst_8 = arith.constant dense<0.000000e+00> : vector<16x8xf32>
    %9 = tpu.matmul %8, %7, %cst_8 {dimension_numbers = #tpu.dot_dimension_numbers<[1], [0], [0], [1], [0, 0, 1, 1], [], []>} : vector<16x64xf32>, vector<64x8xf32>, vector<16x8xf32> -> vector<16x8xf32>
    %c0_9 = arith.constant 0 : index
    %c0_10 = arith.constant 0 : index
    %10 = vector.load %arg6[%c0_9, %c0_10] : memref<16x1xf32, #tpu.memory_space<vmem>>, vector<16x1xf32>
    %11 = vector.broadcast %10 : vector<16x1xf32> to vector<16x8xf32>
    %12 = arith.addf %9, %11 : vector<16x8xf32>
    %13 = vector.extract_strided_slice %12 {offsets = [0, 0], sizes = [8, 8], strides = [1, 1]} : vector<16x8xf32> to vector<8x8xf32>
    %14 = tpu.iota {dimensions = array<i32: 0>} : vector<8x8xi32>
    %c8_i32 = arith.constant 8 : i32
    %15 = vector.broadcast %c8_i32 : i32 to vector<8x8xi32>
    %16 = arith.cmpi slt, %14, %15 : vector<8x8xi32>
    %cst_11 = arith.constant -1.000000e+30 : f32
    %17 = vector.broadcast %cst_11 : f32 to vector<8x8xf32>
    %18 = arith.select %16, %13, %17 : vector<8x8xi1>, vector<8x8xf32>
    %cst_12 = arith.constant dense<0xFF800000> : vector<8xf32>
    %19 = vector.multi_reduction <maximumf>, %18, %cst_12 [0] : vector<8x8xf32> to vector<8xf32>
    %20 = vector.shape_cast %19 : vector<8xf32> to vector<1x8xf32>
    %21 = vector.broadcast %20 : vector<1x8xf32> to vector<8x8xf32>
    %22 = arith.subf %18, %21 : vector<8x8xf32>
    %23 = math.exp %22 : vector<8x8xf32>
    %cst_13 = arith.constant dense<0.000000e+00> : vector<8xf32>
    %24 = vector.multi_reduction <add>, %23, %cst_13 [0] : vector<8x8xf32> to vector<8xf32>
    %25 = vector.shape_cast %24 : vector<8xf32> to vector<1x8xf32>
    %26 = math.log %25 : vector<1x8xf32>
    %27 = vector.broadcast %26 : vector<1x8xf32> to vector<8x8xf32>
    %28 = arith.subf %22, %27 : vector<8x8xf32>
    %29 = arith.mulf %23, %22 : vector<8x8xf32>
    %cst_14 = arith.constant dense<0.000000e+00> : vector<8xf32>
    %30 = vector.multi_reduction <add>, %29, %cst_14 [0] : vector<8x8xf32> to vector<8xf32>
    %31 = vector.shape_cast %30 : vector<8xf32> to vector<1x8xf32>
    %32 = arith.divf %31, %25 : vector<1x8xf32>
    %33 = arith.subf %26, %32 : vector<1x8xf32>
    %c0_15 = arith.constant 0 : index
    %c0_16 = arith.constant 0 : index
    %34 = vector.load %arg2[%c0_15, %c0_16] : memref<8x8xf32, #tpu.memory_space<vmem>>, vector<8x8xf32>
    %35 = arith.addf %18, %34 : vector<8x8xf32>
    %cst_17 = arith.constant dense<0xFF800000> : vector<8xf32>
    %36 = vector.multi_reduction <maximumf>, %35, %cst_17 [0] : vector<8x8xf32> to vector<8xf32>
    %37 = vector.shape_cast %36 : vector<8xf32> to vector<1x8xf32>
    %38 = vector.broadcast %37 : vector<1x8xf32> to vector<8x8xf32>
    %39 = arith.cmpf oge, %35, %38 : vector<8x8xf32>
    %40 = arith.andi %39, %16 : vector<8x8xi1>
    %c8_i32_18 = arith.constant 8 : i32
    %41 = vector.broadcast %c8_i32_18 : i32 to vector<8x8xi32>
    %42 = arith.select %40, %14, %41 : vector<8x8xi1>, vector<8x8xi32>
    %cst_19 = arith.constant dense<2147483647> : vector<8xi32>
    %43 = vector.multi_reduction <minsi>, %42, %cst_19 [0] : vector<8x8xi32> to vector<8xi32>
    %44 = vector.shape_cast %43 : vector<8xi32> to vector<1x8xi32>
    %45 = vector.broadcast %44 : vector<1x8xi32> to vector<8x8xi32>
    %46 = arith.cmpi eq, %14, %45 : vector<8x8xi32>
    %cst_20 = arith.constant 0.000000e+00 : f32
    %47 = vector.broadcast %cst_20 : f32 to vector<8x8xf32>
    %48 = arith.select %46, %28, %47 : vector<8x8xi1>, vector<8x8xf32>
    %cst_21 = arith.constant dense<0.000000e+00> : vector<8xf32>
    %49 = vector.multi_reduction <add>, %48, %cst_21 [0] : vector<8x8xf32> to vector<8xf32>
    %50 = vector.shape_cast %49 : vector<8xf32> to vector<1x8xf32>
    %51 = vector.extract_strided_slice %12 {offsets = [8, 0], sizes = [1, 8], strides = [1, 1]} : vector<16x8xf32> to vector<1x8xf32>
    %52 = tpu.iota {dimensions = array<i32: 0>} : vector<8x8xi32>
    %c0_i32 = arith.constant 0 : i32
    %53 = vector.broadcast %c0_i32 : i32 to vector<8x8xi32>
    %54 = arith.cmpi eq, %52, %53 : vector<8x8xi32>
    %55 = arith.sitofp %44 : vector<1x8xi32> to vector<1x8xf32>
    %cst_22 = arith.constant 0.000000e+00 : f32
    %56 = vector.shape_cast %55 : vector<1x8xf32> to vector<1x8xf32>
    %57 = vector.broadcast %56 : vector<1x8xf32> to vector<8x8xf32>
    %58 = vector.broadcast %cst_22 : f32 to vector<8x8xf32>
    %59 = arith.select %54, %57, %58 : vector<8x8xi1>, vector<8x8xf32>
    %c1_i32 = arith.constant 1 : i32
    %60 = vector.broadcast %c1_i32 : i32 to vector<8x8xi32>
    %61 = arith.cmpi eq, %52, %60 : vector<8x8xi32>
    %62 = vector.shape_cast %50 : vector<1x8xf32> to vector<1x8xf32>
    %63 = vector.broadcast %62 : vector<1x8xf32> to vector<8x8xf32>
    %64 = arith.select %61, %63, %59 : vector<8x8xi1>, vector<8x8xf32>
    %c2_i32 = arith.constant 2 : i32
    %65 = vector.broadcast %c2_i32 : i32 to vector<8x8xi32>
    %66 = arith.cmpi eq, %52, %65 : vector<8x8xi32>
    %67 = vector.shape_cast %33 : vector<1x8xf32> to vector<1x8xf32>
    %68 = vector.broadcast %67 : vector<1x8xf32> to vector<8x8xf32>
    %69 = arith.select %66, %68, %64 : vector<8x8xi1>, vector<8x8xf32>
    %c3_i32 = arith.constant 3 : i32
    %70 = vector.broadcast %c3_i32 : i32 to vector<8x8xi32>
    %71 = arith.cmpi eq, %52, %70 : vector<8x8xi32>
    %72 = vector.shape_cast %51 : vector<1x8xf32> to vector<1x8xf32>
    %73 = vector.broadcast %72 : vector<1x8xf32> to vector<8x8xf32>
    %74 = arith.select %71, %73, %69 : vector<8x8xi1>, vector<8x8xf32>
    %c0_23 = arith.constant 0 : index
    %c0_24 = arith.constant 0 : index
    %75 = vector.load %arg7[%c0_23, %c0_24] : memref<8x8xf32, #tpu.memory_space<vmem>>, vector<8x8xf32>
    tpu.vector_store %arg7[%c0_23, %c0_24], %74 {strides = array<i32>} : memref<8x8xf32, #tpu.memory_space<vmem>>, vector<8x8xf32>,
    return
  }
  func.func @transform_0(%arg0: i32) -> (i32, i32) {
    %c0_i32 = arith.constant 0 : i32
    %c0_i32_0 = arith.constant 0 : i32
    return %c0_i32, %arg0 : i32, i32
  }
  func.func @transform_1(%arg0: i32) -> (i32, i32) {
    %c0_i32 = arith.constant 0 : i32
    %c0_i32_0 = arith.constant 0 : i32
    return %c0_i32, %arg0 : i32, i32
  }
  func.func @transform_2(%arg0: i32) -> (i32, i32) {
    %c0_i32 = arith.constant 0 : i32
    %c0_i32_0 = arith.constant 0 : i32
    %c0_i32_1 = arith.constant 0 : i32
    return %c0_i32, %c0_i32_0 : i32, i32
  }
  func.func @transform_3(%arg0: i32) -> (i32, i32) {
    %c0_i32 = arith.constant 0 : i32
    %c0_i32_0 = arith.constant 0 : i32
    %c0_i32_1 = arith.constant 0 : i32
    return %c0_i32, %c0_i32_0 : i32, i32
  }
  func.func @transform_4(%arg0: i32) -> (i32, i32) {
    %c0_i32 = arith.constant 0 : i32
    %c0_i32_0 = arith.constant 0 : i32
    %c0_i32_1 = arith.constant 0 : i32
    return %c0_i32, %c0_i32_0 : i32, i32
  }
  func.func @transform_5(%arg0: i32) -> (i32, i32) {
    %c0_i32 = arith.constant 0 : i32
    %c0_i32_0 = arith.constant 0 : i32
    %c0_i32_1 = arith.constant 0 : i32
    return %c0_i32, %c0_i32_0 : i32, i32
  }
  func.func @transform_6(%arg0: i32) -> (i32, i32) {
    %c0_i32 = arith.constant 0 : i32
    %c0_i32_0 = arith.constant 0 : i32
    return %c0_i32, %arg0 : i32, i32
  }
}

</mosaic_0001>

<llo_original>
// kernel: tpu_custom_call.1
$region0: #{tpu_custom_call.1}
  #allocation0 [shape = 'u32[]', space=smem, size = 0x4, offset = 0x4, fixed_abs, tag = 'smem constant byte address 0x4 - core index']
  #allocation1 [shape = 'u32[144,128]{1,0:T(1,128)}', space=vmem, size = 0x12000, scoped, tag = 'internal scratch']
  %s0 = inlined_call_operand.vmem [shape: f32[16,8], index: 0, kind: input, shape index: {}]
  %s1 = inlined_call_operand.vmem [shape: f32[8,8], index: 1, kind: input, shape index: {}]
  %s2 = inlined_call_operand.vmem [shape: f32[64,16], index: 2, kind: input, shape index: {}]
  %s3 = inlined_call_operand.vmem [shape: f32[64,1], index: 3, kind: input, shape index: {}]
  %s4 = inlined_call_operand.vmem [shape: f32[16,64], index: 4, kind: input, shape index: {}]
  %s5 = inlined_call_operand.vmem [shape: f32[16,1], index: 5, kind: input, shape index: {}]
  %s6 = inlined_call_operand.hbm [shape: f32[8,8], index: 6, kind: output, shape index: {}]
  %s7 = sld [smem:[#allocation0]]
  $region34: #{tpu_custom_call.1} parent=0
    _
  %s9 = ssub.s32 1, %s7
  %s10 = scalar_select 0, %s9, %s7
  $region1: #{tpu_custom_call.1} parent=0
    #allocation2 [shape = 'u8[4096]{0}', space=vmem, size = 0x1000, scoped, tag = 'output window, operand 0, single buffered']
    #allocation3 [shape = 's32[1]{0}', space=sflag, size = 0x4, scoped, tag = 'scoped memory for tpu_custom_call.1']
    %11 = vsyncpa [#allocation3], 0
    // Predicated region
    $region2: #{tpu_custom_call.1} parent=1 // pred_check
      _
    $region3: #{tpu_custom_call.1} parent=1 // pred_check_branch
      %13 = sbr.rel (0) target = $region5
    $region4: #{tpu_custom_call.1} parent=1 // pred_region
      _
    $region5: #{tpu_custom_call.1} parent=1 // pred_fallthru
      _
    // Predicated region
    $region6: #{tpu_custom_call.1} parent=1 // pred_check
      _
    $region7: #{tpu_custom_call.1} parent=1 // pred_check_branch
      %15 = sbr.rel (0) target = $region9
    $region8: #{tpu_custom_call.1} parent=1 // pred_region
      _
    $region9: #{tpu_custom_call.1} parent=1 // pred_fallthru
      _
    // Predicated region
    $region10: #{tpu_custom_call.1} parent=1 // pred_check
      _
    $region11: #{tpu_custom_call.1} parent=1 // pred_check_branch
      %17 = sbr.rel (0) target = $region13
    $region12: #{tpu_custom_call.1} parent=1 // pred_region
      _
    $region13: #{tpu_custom_call.1} parent=1 // pred_fallthru
      _
    // Predicated region
    $region14: #{tpu_custom_call.1} parent=1 // pred_check
      _
    $region15: #{tpu_custom_call.1} parent=1 // pred_check_branch
      %19 = sbr.rel (0) target = $region17
    $region16: #{tpu_custom_call.1} parent=1 // pred_region
      _
    $region17: #{tpu_custom_call.1} parent=1 // pred_fallthru
      _
    // Predicated region
    $region18: #{tpu_custom_call.1} parent=1 // pred_check
      _
    $region19: #{tpu_custom_call.1} parent=1 // pred_check_branch
      %21 = sbr.rel (0) target = $region21
    $region20: #{tpu_custom_call.1} parent=1 // pred_region
      _
    $region21: #{tpu_custom_call.1} parent=1 // pred_fallthru
      _
    // Predicated region
    $region22: #{tpu_custom_call.1} parent=1 // pred_check
      _
    $region23: #{tpu_custom_call.1} parent=1 // pred_check_branch
      %23 = sbr.rel (0) target = $region25
    $region24: #{tpu_custom_call.1} parent=1 // pred_region
      _
    $region25: #{tpu_custom_call.1} parent=1 // pred_fallthru
      _
    %v24 = vld [vmem:[%s2] sm:$0xff]
    %v25 = vld [vmem:[%s2 + $0x8] sm:$0xff]
    %v26 = vld [vmem:[%s2 + $0x10] sm:$0xff]
    %v27 = vld [vmem:[%s2 + $0x18] sm:$0xff]
    %v28 = vld [vmem:[%s2 + $0x20] sm:$0xff]
    %v29 = vld [vmem:[%s2 + $0x28] sm:$0xff]
    %v30 = vld [vmem:[%s2 + $0x30] sm:$0xff]
    %v31 = vld [vmem:[%s2 + $0x38] sm:$0xff]
    %v32 = vld [vmem:[%s0] sm:$0xff]
    %v33 = vld [vmem:[%s0 + $0x8] sm:$0xff]
    %v34 = vld [vmem:[%s3] sm:$0xff]
    %v35 = vld [vmem:[%s3 + $0x8] sm:$0xff]
    %v36 = vld [vmem:[%s3 + $0x10] sm:$0xff]
    %v37 = vld [vmem:[%s3 + $0x18] sm:$0xff]
    %v38 = vld [vmem:[%s3 + $0x20] sm:$0xff]
    %v39 = vld [vmem:[%s3 + $0x28] sm:$0xff]
    %v40 = vld [vmem:[%s3 + $0x30] sm:$0xff]
    %v41 = vld [vmem:[%s3 + $0x38] sm:$0xff]
    %43 = vset.pattern.permute.xlu0 0
    %44 = vperm.xlu0 %43, %v34
    %v45 = vpop.permute.xlu0 %44
    %48 = vset.pattern.permute.xlu0 0
    %49 = vperm.xlu0 %48, %v35
    %v50 = vpop.permute.xlu0 %49
    %53 = vset.pattern.permute.xlu0 0
    %54 = vperm.xlu0 %53, %v36
    %v55 = vpop.permute.xlu0 %54
    %58 = vset.pattern.permute.xlu0 0
    %59 = vperm.xlu0 %58, %v37
    %v60 = vpop.permute.xlu0 %59
    %63 = vset.pattern.permute.xlu0 0
    %64 = vperm.xlu0 %63, %v38
    %v65 = vpop.permute.xlu0 %64
    %68 = vset.pattern.permute.xlu0 0
    %69 = vperm.xlu0 %68, %v39
    %v70 = vpop.permute.xlu0 %69
    %73 = vset.pattern.permute.xlu0 0
    %74 = vperm.xlu0 %73, %v40
    %v75 = vpop.permute.xlu0 %74
    %78 = vset.pattern.permute.xlu0 0
    %79 = vperm.xlu0 %78, %v41
    %v80 = vpop.permute.xlu0 %79
    %vm82 = vcmask 130048
    %v84 = vsel %vm82, %v24, 0
    %v87 = vsel %vm82, %v25, 0
    %v90 = vsel %vm82, %v26, 0
    %v93 = vsel %vm82, %v27, 0
    %v96 = vsel %vm82, %v28, 0
    %v99 = vsel %vm82, %v29, 0
    %v102 = vsel %vm82, %v30, 0
    %v105 = vsel %vm82, %v31, 0
    %107 = vmatprep.subr.mxu0 0.0
    %108 = vmatpush1.msra.mxu0 %v32
    %109 = vmatprep.subr.mxu0 0.0
    %110 = vmatpush1.msra.mxu0 %v33
    %111 = vmatprep.subr.mxu0 0.0
    %112 = vmatpush1.msra.mxu0 0.0
    %113 = vmatprep.subr.mxu0 0.0
    %114 = vmatpush1.msra.mxu0 0.0
    %115 = vmatprep.subr.mxu0 0.0
    %116 = vmatpush1.msra.mxu0 0.0
    %117 = vmatprep.subr.mxu0 0.0
    %118 = vmatpush1.msra.mxu0 0.0
    %119 = vmatprep.subr.mxu0 0.0
    %120 = vmatpush1.msra.mxu0 0.0
    %121 = vmatprep.subr.mxu0 0.0
    %122 = vmatpush1.msra.mxu0 0.0
    %123 = vmatprep.subr.mxu0 0.0
    %124 = vmatpush1.msra.mxu0 0.0
    %125 = vmatprep.subr.mxu0 0.0
    %126 = vmatpush1.msra.mxu0 0.0
    %127 = vmatprep.subr.mxu0 0.0
    %128 = vmatpush1.msra.mxu0 0.0
    %129 = vmatprep.subr.mxu0 0.0
    %130 = vmatpush1.msra.mxu0 0.0
    %131 = vmatprep.subr.mxu0 0.0
    %132 = vmatpush1.msra.mxu0 0.0
    %133 = vmatprep.subr.mxu0 0.0
    %134 = vmatpush1.msra.mxu0 0.0
    %135 = vmatprep.subr.mxu0 0.0
    %136 = vmatpush1.msra.mxu0 0.0
    %137 = vmatprep.subr.mxu0 0.0
    %138 = vmatpush1.msra.mxu0 0.0
    %139 = vmatprep.subr.mxu0 0.0
    %140 = vmatpush1.msra.mxu0 0.0
    %141 = vmatprep.subr.mxu0 0.0
    %142 = vmatpush1.msra.mxu0 0.0
    %143 = vmatprep.subr.mxu0 0.0
    %144 = vmatpush1.msra.mxu0 0.0
    %145 = vmatprep.subr.mxu0 0.0
    %146 = vmatpush1.msra.mxu0 0.0
    %147 = vmatprep.subr.mxu0 0.0
    %148 = vmatpush1.msra.mxu0 0.0
    %149 = vmatprep.subr.mxu0 0.0
    %150 = vmatpush1.msra.mxu0 0.0
    %151 = vmatprep.subr.mxu0 0.0
    %152 = vmatpush1.msra.mxu0 0.0
    %153 = vmatprep.subr.mxu0 0.0
    %154 = vmatpush1.msra.mxu0 0.0
    %155 = vmatprep.subr.mxu0 0.0
    %156 = vmatpush1.msra.mxu0 0.0
    %157 = vmatprep.subr.mxu0 0.0
    %158 = vmatpush1.msra.mxu0 0.0
    %159 = vmatprep.subr.mxu0 0.0
    %160 = vmatpush1.msra.mxu0 0.0
    %161 = vmatprep.subr.mxu0 0.0
    %162 = vmatpush1.msra.mxu0 0.0
    %163 = vmatprep.subr.mxu0 0.0
    %164 = vmatpush1.msra.mxu0 0.0
    %165 = vmatprep.subr.mxu0 0.0
    %166 = vmatpush1.msra.mxu0 0.0
    %167 = vmatprep.subr.mxu0 0.0
    %168 = vmatpush1.msra.mxu0 0.0
    %169 = vmatprep.subr.mxu0 0.0
    %170 = vmatpush1.msra.mxu0 0.0
    %171 = vmatprep.mubr.f32.mxu0 0.0
    %172 = vmatmul.mubr.f32.gmra.mrb[0].mxu0 %v84
    %v173 = vpop.f32.mrb[0].mxu0
    %v174 = vadd.f32 %v45, %v173
    %v175 = vpop.f32.mrb[0].mxu0
    %176 = vmatprep.mubr.f32.mxu0 0.0
    %177 = vmatmul.mubr.f32.gmra.mrb[0].mxu0 %v87
    %v178 = vpop.f32.mrb[0].mxu0
    %v179 = vadd.f32 %v50, %v178
    %v180 = vpop.f32.mrb[0].mxu0
    %181 = vmatprep.mubr.f32.mxu0 0.0
    %182 = vmatmul.mubr.f32.gmra.mrb[0].mxu0 %v90
    %v183 = vpop.f32.mrb[0].mxu0
    %v184 = vadd.f32 %v55, %v183
    %v185 = vpop.f32.mrb[0].mxu0
    %186 = vmatprep.mubr.f32.mxu0 0.0
    %187 = vmatmul.mubr.f32.gmra.mrb[0].mxu0 %v93
    %v188 = vpop.f32.mrb[0].mxu0
    %v189 = vadd.f32 %v60, %v188
    %v190 = vpop.f32.mrb[0].mxu0
    %191 = vmatprep.mubr.f32.mxu0 0.0
    %192 = vmatmul.mubr.f32.gmra.mrb[0].mxu0 %v96
    %v193 = vpop.f32.mrb[0].mxu0
    %v194 = vadd.f32 %v65, %v193
    %v195 = vpop.f32.mrb[0].mxu0
    %196 = vmatprep.mubr.f32.mxu0 0.0
    %197 = vmatmul.mubr.f32.gmra.mrb[0].mxu0 %v99
    %v198 = vpop.f32.mrb[0].mxu0
    %v199 = vadd.f32 %v70, %v198
    %v200 = vpop.f32.mrb[0].mxu0
    %201 = vmatprep.mubr.f32.mxu0 0.0
    %202 = vmatmul.mubr.f32.gmra.mrb[0].mxu0 %v102
    %v203 = vpop.f32.mrb[0].mxu0
    %v204 = vadd.f32 %v75, %v203
    %v205 = vpop.f32.mrb[0].mxu0
    %206 = vmatprep.mubr.f32.mxu0 0.0
    %207 = vmatmul.mubr.f32.gmra.mrb[0].mxu0 %v105
    %v208 = vpop.f32.mrb[0].mxu0
    %v209 = vadd.f32 %v80, %v208
    %v210 = vpop.f32.mrb[0].mxu0
    %211 = vdwg.mxu0
    %v212 = vmax.f32 %v174, 0.0
    %v213 = vmax.f32 %v179, 0.0
    %v214 = vmax.f32 %v184, 0.0
    %v215 = vmax.f32 %v189, 0.0
    %v216 = vmax.f32 %v194, 0.0
    %v217 = vmax.f32 %v199, 0.0
    %v218 = vmax.f32 %v204, 0.0
    %v219 = vmax.f32 %v209, 0.0
    %v220 = vld [vmem:[%s4] sm:$0xff]
    %v221 = vld [vmem:[%s4 + $0x8] sm:$0xff]
    %v222 = vld [vmem:[%s5] sm:$0xff]
    %v223 = vld [vmem:[%s5 + $0x8] sm:$0xff]
    %225 = vset.pattern.permute.xlu0 0
    %226 = vperm.xlu0 %225, %v222
    %v227 = vpop.permute.xlu0 %226
    %230 = vset.pattern.permute.xlu0 0
    %231 = vperm.xlu0 %230, %v223
    %v232 = vpop.permute.xlu0 %231
    %vm234 = vcmask 523264
    %v236 = vsel %vm234, %v220, 0
    %v239 = vsel %vm234, %v221, 0
    %241 = vmatprep.subr.mxu0 0.0
    %242 = vmatpush1.msra.mxu0 %v212
    %243 = vmatprep.subr.mxu0 0.0
    %244 = vmatpush1.msra.mxu0 %v213
    %245 = vmatprep.subr.mxu0 0.0
    %246 = vmatpush1.msra.mxu0 %v214
    %247 = vmatprep.subr.mxu0 0.0
    %248 = vmatpush1.msra.mxu0 %v215
    %249 = vmatprep.subr.mxu0 0.0
    %250 = vmatpush1.msra.mxu0 %v216
    %251 = vmatprep.subr.mxu0 0.0
    %252 = vmatpush1.msra.mxu0 %v217
    %253 = vmatprep.subr.mxu0 0.0
    %254 = vmatpush1.msra.mxu0 %v218
    %255 = vmatprep.subr.mxu0 0.0
    %256 = vmatpush1.msra.mxu0 %v219
    %257 = vmatprep.subr.mxu0 0.0
    %258 = vmatpush1.msra.mxu0 0.0
    %259 = vmatprep.subr.mxu0 0.0
    %260 = vmatpush1.msra.mxu0 0.0
    %261 = vmatprep.subr.mxu0 0.0
    %262 = vmatpush1.msra.mxu0 0.0
    %263 = vmatprep.subr.mxu0 0.0
    %264 = vmatpush1.msra.mxu0 0.0
    %265 = vmatprep.subr.mxu0 0.0
    %266 = vmatpush1.msra.mxu0 0.0
    %267 = vmatprep.subr.mxu0 0.0
    %268 = vmatpush1.msra.mxu0 0.0
    %269 = vmatprep.subr.mxu0 0.0
    %270 = vmatpush1.msra.mxu0 0.0
    %271 = vmatprep.subr.mxu0 0.0
    %272 = vmatpush1.msra.mxu0 0.0
    %273 = vmatprep.subr.mxu0 0.0
    %274 = vmatpush1.msra.mxu0 0.0
    %275 = vmatprep.subr.mxu0 0.0
    %276 = vmatpush1.msra.mxu0 0.0
    %277 = vmatprep.subr.mxu0 0.0
    %278 = vmatpush1.msra.mxu0 0.0
    %279 = vmatprep.subr.mxu0 0.0
    %280 = vmatpush1.msra.mxu0 0.0
    %281 = vmatprep.subr.mxu0 0.0
    %282 = vmatpush1.msra.mxu0 0.0
    %283 = vmatprep.subr.mxu0 0.0
    %284 = vmatpush1.msra.mxu0 0.0
    %285 = vmatprep.subr.mxu0 0.0
    %286 = vmatpush1.msra.mxu0 0.0
    %287 = vmatprep.subr.mxu0 0.0
    %288 = vmatpush1.msra.mxu0 0.0
    %289 = vmatprep.subr.mxu0 0.0
    %290 = vmatpush1.msra.mxu0 0.0
    %291 = vmatprep.subr.mxu0 0.0
    %292 = vmatpush1.msra.mxu0 0.0
    %293 = vmatprep.subr.mxu0 0.0
    %294 = vmatpush1.msra.mxu0 0.0
    %295 = vmatprep.subr.mxu0 0.0
    %296 = vmatpush1.msra.mxu0 0.0
    %297 = vmatprep.subr.mxu0 0.0
    %298 = vmatpush1.msra.mxu0 0.0
    %299 = vmatprep.subr.mxu0 0.0
    %300 = vmatpush1.msra.mxu0 0.0
    %301 = vmatprep.subr.mxu0 0.0
    %302 = vmatpush1.msra.mxu0 0.0
    %303 = vmatprep.subr.mxu0 0.0
    %304 = vmatpush1.msra.mxu0 0.0
    %305 = vmatprep.mubr.f32.mxu0 0.0
    %306 = vmatmul.mubr.f32.gmra.mrb[0].mxu0 %v236
    %v307 = vpop.f32.mrb[0].mxu0
    %v308 = vadd.f32 %v227, %v307
    %v309 = vpop.f32.mrb[0].mxu0
    %310 = vmatprep.mubr.f32.mxu0 0.0
    %311 = vmatmul.mubr.f32.gmra.mrb[0].mxu0 %v239
    %v312 = vpop.f32.mrb[0].mxu0
    %v313 = vadd.f32 %v232, %v312
    %v314 = vpop.f32.mrb[0].mxu0
    %315 = vdwg.mxu0
    %v316 = vlaneseq
    %v317 = vshrl.u32 %v316, 7
    %vm318 = vcmp.lt.s32.totalorder %v317, 8
    %v319 = vsel %vm318, %v308, -1e+30
    %vm320 = vcmask 64512
    %v321 = vsel %vm320, %v319, -inf
    %v322 = vrot.slane %v321, 4
    %v323 = vmax.f32 %v321, %v322
    %v324 = vrot.slane %v323, 2
    %v325 = vmax.f32 %v323, %v324
    %v326 = vrot.slane %v325, 1
    %v327 = vmax.f32 %v325, %v326
    %v328 = vsub.f32 %v319, %v327
    %v329 = vmul.f32 %v328, 1.442695
    %v330 = vpow.pop %v329
    %v331 = vsel %vm320, %v330, 0.0
    %v332 = vrot.slane %v331, 4
    %v333 = vadd.f32 %v331, %v332
    %v334 = vrot.slane %v333, 2
    %v335 = vadd.f32 %v333, %v334
    %v336 = vrot.slane %v335, 1
    %v337 = vadd.f32 %v335, %v336
    %v338 = vlog2.pop %v337
    %v339 = vmul.f32 %v338, 0.6931472
    %v340 = vsub.f32 %v328, %v339
    %v341 = vmul.f32 %v330, %v328
    %v342 = vsel %vm320, %v341, 0.0
    %v343 = vrot.slane %v342, 4
    %v344 = vadd.f32 %v342, %v343
    %v345 = vrot.slane %v344, 2
    %v346 = vadd.f32 %v344, %v345
    %v347 = vrot.slane %v346, 1
    %v348 = vadd.f32 %v346, %v347
    %v349 = vrcp.pop %v337
    %v350 = vmul.f32 %v348, %v349
    %v351 = vsub.f32 %v339, %v350
    %v352 = vld [vmem:[%s1] sm:$0xff]
    %v353 = vadd.f32 %v319, %v352
    %v354 = vsel %vm320, %v353, -inf
    %v355 = vrot.slane %v354, 4
    %v356 = vmax.f32 %v354, %v355
    %v357 = vrot.slane %v356, 2
    %v358 = vmax.f32 %v356, %v357
    %v359 = vrot.slane %v358, 1
    %v360 = vmax.f32 %v358, %v359
    %vm361 = vcmp.ge.f32.partialorder %v353, %v360
    %vm362 = vmand %vm361, %vm318
    %v363 = vsel %vm362, %v317, 8
    %v364 = vsel %vm320, %v363, 2147483647
    %v365 = vrot.slane %v364, 4
    %vm366 = vcmp.lt.s32.totalorder %v364, %v365
    %v367 = vsel %vm366, %v364, %v365
    %v368 = vrot.slane %v367, 2
    %vm369 = vcmp.lt.s32.totalorder %v367, %v368
    %v370 = vsel %vm369, %v367, %v368
    %v371 = vrot.slane %v370, 1
    %vm372 = vcmp.lt.s32.totalorder %v370, %v371
    %v373 = vsel %vm372, %v370, %v371
    %vm374 = vcmp.eq.s32.totalorder %v317, %v373
    %v375 = vsel %vm374, %v340, 0.0
    %v376 = vsel %vm320, %v375, 0.0
    %v377 = vrot.slane %v376, 4
    %v378 = vadd.f32 %v376, %v377
    %v379 = vrot.slane %v378, 2
    %v380 = vadd.f32 %v378, %v379
    %v381 = vrot.slane %v380, 1
    %v382 = vadd.f32 %v380, %v381
    %vm383 = vcmp.eq.s32.totalorder %v317, 0
    %v384 = vcvt.s32.f32 %v373
    %v385 = vsel %vm383, %v384, 0.0
    %vm386 = vcmp.eq.s32.totalorder %v317, 1
    %v387 = vsel %vm386, %v382, %v385
    %vm388 = vcmp.eq.s32.totalorder %v317, 2
    %v389 = vsel %vm388, %v351, %v387
    %vm390 = vcmp.eq.s32.totalorder %v317, 3
    %v391 = vlaneseq
    %v392 = vshrl.u32 %v391, 7
    %v393 = vsub.s32 0, %v392
    %v394 = vrot.slane %v313, %v393
    %v395 = vsel %vm390, %v394, %v389
    %396 = vst.msk [vmem:[#allocation2] sm:$0xff] %vm320, %v395
    // Predicated region
    $region26: #{tpu_custom_call.1} parent=1 // pred_check
      _
    $region27: #{tpu_custom_call.1} parent=1 // pred_check_branch
      %398 = sbr.rel (0) target = $region29
    $region28: #{tpu_custom_call.1} parent=1 // pred_region
      %s400 = ssub.s32 128, 128
      %401 = vsyncadd [#allocation3], %s400
      %s403 = sshll.u32 [#allocation2], 4
      %s404 = int_to_ptr.vmem [resolvable:$true] %s403
      %406 = dma.vmem_to_hbm [thread:$0]  %s404, 128, %s6, [#allocation3]
    $region29: #{tpu_custom_call.1} parent=1 // pred_fallthru
      _
    // Predicated region
    $region30: #{tpu_custom_call.1} parent=1 // pred_check
      _
    $region31: #{tpu_custom_call.1} parent=1 // pred_check_branch
      %408 = sbr.rel (0) target = $region33
    $region32: #{tpu_custom_call.1} parent=1 // pred_region
      %409 = dma.done [#allocation3], 128
    $region33: #{tpu_custom_call.1} parent=1 // pred_fallthru
      _
    %410 = vsyncpa [#allocation3], 1

</llo_original>
